<compile_context>
chip_gen: v7x
topology: tpu7x:2x2x1
jax: 0.10.0
libtpu: 0.0.40
codegen_flags: <defaults>
</compile_context>

<pallas_src>
import math

import jax
import jax.numpy as jnp
from jax.experimental import pallas as pl
from jax.experimental.pallas import tpu as pltpu


def _lpfs_gate_mul_kernel(g_ref, x_ref, o_ref):
    """Applies the precomputed LPFS gate row to one tile of rows.

    g_ref : VMEM (1, LANE)      -> gate, one value per lane column (tiny, resident)
    x_ref : VMEM (TR, LANE)     -> input rows   (TR = row tile)
    o_ref : VMEM (TR, LANE)     -> gated output rows
    """
    # Implicit sublane broadcast of the (1, LANE) gate row; explicit cast keeps
    # the store dtype correct when the gate is f32 and x is bf16/fp16.
    o_ref[...] = (x_ref[...] * g_ref[...]).astype(o_ref.dtype)


def _compute_gate(param, epsilon, alpha, tau, init_val):
    """lpfs_pp on the tiny (F, 1) parameter, in plain JAX (hoisted out of the kernel)."""
    # TODO(synk): arctan has no reliable Mosaic lowering; the O(F) gate math stays
    #             in the JAX wrapper (vs O(B*F*E) gating inside the kernel).
    p = param.astype(jnp.float32)
    p2 = p * p
    g1 = p2 / (p2 + epsilon)
    g2 = alpha * (epsilon ** (1.0 / tau)) * jnp.arctan(p)
    g = jnp.where(p > 0, g2 + g1, g2 - g1)
    if init_val != 1.0:
        g = g / init_val
    return g  # (F, 1) float32


def _round_up(x, m):
    return -(-x // m) * m


def _round_down(x, m):
    return (x // m) * m


def _generation_config():
    """Per-TPU-generation (tile-bytes target, vmem_limit_bytes, #TensorCores)."""
    try:
        kind = jax.devices()[0].device_kind.lower()
    except Exception:  # pragma: no cover - defensive; fall back to generic config
        kind = ""
    if "v7" in kind:
        # 64 MiB physical VMEM per TC, 3.2 TB/s HBM, 2 TCs share the chip.
        return 8 << 20, 48 << 20, 2
    if "v6" in kind:
        # 128 MiB physical VMEM, ~1.4 TB/s HBM.
        return 10 << 20, 64 << 20, 1
    if "v5 lite" in kind or "v5e" in kind or "v5litepod" in kind:
        # 128 MiB physical VMEM but 16 MiB default scoped cap -> raise it.
        return 5 << 20, 40 << 20, 1
    # Unknown / other generations: conservative but still well above 2 MiB.
    return 6 << 20, 48 << 20, 1


def lpfs_forward(x, param, epsilon, current_step,
                 epsilon_update_frequency=100,
                 alpha=10.0, tau=2.0, init_val=1.0,
                 row_tile=None, donate_x=False):
    """Pallas port of lpfs.forward. Returns (gated_x, new_epsilon)."""
    # Python-side state update, exactly as in the PyTorch module.
    # TODO(synk): epsilon/current_step are Python values (module state); calling
    #             under jit with traced step would retrace, as in the original.
    if current_step % epsilon_update_frequency == 0:
        epsilon = epsilon * 0.9978

    b, f, e = x.shape
    assert param.shape == (f, 1)
    fe = f * e
    itemsize = jnp.dtype(x.dtype).itemsize
    # Sublane packing for this dtype: 8 rows/vreg for f32, 16 for bf16, 32 for i8.
    packing = max(8, (8 * 4) // itemsize)

    target_tile_bytes, vmem_limit_bytes, num_tc = _generation_config()

    # ---- Gate: compute once, expand to a lane-dense row --------------------
    g = _compute_gate(param, epsilon, alpha, tau, init_val)        # (F, 1) f32
    g_row = jnp.broadcast_to(g, (f, e)).reshape(1, fe)             # (1, FE) f32

    # ---- Lane-density: fold batch rows into lanes if FE % 128 != 0 ---------
    fold = 1
    if fe % 128 != 0:
        r_min = 128 // math.gcd(fe, 128)
        if r_min <= b and b % r_min == 0:
            fold = r_min
    rows = b // fold
    lane = fe * fold
    x2 = x.reshape(rows, lane)
    if fold > 1:
        g_row = jnp.tile(g_row, (1, fold))                          # (1, lane)
    if itemsize < 4:
        # Native bf16/fp16 multiply in the kernel (VALU/vreg pressure insurance).
        g_row = g_row.astype(x.dtype)

    # ---- Row-tile sizing (generation-tuned, double-buffered in+out) --------
    lane_bytes = max(1, lane * itemsize)
    if row_tile is None:
        budget_rows = max(packing, _round_down(max(1, target_tile_bytes // lane_bytes),
                                               packing))
        if rows <= budget_rows:
            row_tile = rows                      # single block == full dim (legal)
        else:
            row_tile = budget_rows               # multiple of sublane packing
        if num_tc >= 2 and rows >= 2 * packing:
            # Shard the row axis across both TensorCores: >= 2 grid steps,
            # prefer an even step count for balance.
            half = _round_up(pl.cdiv(rows, 2), packing)
            row_tile = min(row_tile, half)
            steps = pl.cdiv(rows, row_tile)
            if steps > 1 and steps % 2 == 1:
                alt = _round_up(pl.cdiv(rows, steps + 1), packing)
                if alt >= packing and pl.cdiv(rows, alt) % 2 == 0:
                    row_tile = alt
    row_tile = int(min(row_tile, rows))
    grid = (pl.cdiv(rows, row_tile),)

    cost = pl.CostEstimate(
        flops=rows * lane,
        transcendentals=0,
        bytes_accessed=2 * rows * lane * itemsize + lane * jnp.dtype(g_row.dtype).itemsize,
    )

    aliases = {1: 0} if donate_x else {}

    out2 = pl.pallas_call(
        _lpfs_gate_mul_kernel,
        out_shape=jax.ShapeDtypeStruct((rows, lane), x.dtype),
        grid=grid,
        in_specs=[
            pl.BlockSpec((1, lane), lambda i: (0, 0)),            # gate row (resident)
            pl.BlockSpec((row_tile, lane), lambda i: (i, 0)),     # x rows
        ],
        out_specs=pl.BlockSpec((row_tile, lane), lambda i: (i, 0)),
        compiler_params=pltpu.CompilerParams(
            dimension_semantics=("parallel",),
            vmem_limit_bytes=vmem_limit_bytes,
        ),
        cost_estimate=cost,
        input_output_aliases=aliases,
    )(g_row, x2)

    return out2.reshape(b, f, e), epsilon


def _lpfs_reference(x, param, epsilon, alpha=10.0, tau=2.0, init_val=1.0):
    """Pure-JAX reference of lpfs_pp + gating (for correctness check)."""
    p = param.astype(jnp.float32)
    g1 = p * p / (p * p + epsilon)
    g2 = alpha * (epsilon ** (1.0 / tau)) * jnp.arctan(p)
    g = jnp.where(p > 0, g2 + g1, g2 - g1) / init_val
    return (x * g.reshape(1, param.shape[0], 1)).astype(x.dtype)


if __name__ == "__main__":
    key = jax.random.PRNGKey(0)
    kx, kp, kx2, kx3, kx4 = jax.random.split(key, 5)

    # ---- Test 1: module defaults (param = ones, step 0 decays epsilon) ----
    B, F, E = 2, 4, 8          # batch, feature_num, embedding dim
    x = jax.random.normal(kx, (B, F, E), dtype=jnp.float32)
    param = jnp.ones((F, 1), dtype=jnp.float32)       # nn.Parameter(torch.ones(F,1))
    out, eps1 = lpfs_forward(x, param, 0.1, current_step=0)
    out = jax.block_until_ready(out)
    ref = _lpfs_reference(x, param, eps1)
    assert jnp.allclose(out, ref, atol=1e-5, rtol=1e-5), "mismatch vs reference (test 1)"

    # ---- Test 2: signed parameter + bf16 activations (native bf16 gate path) ----
    B2, F2, E2 = 64, 32, 16
    x2 = jax.random.normal(kx2, (B2, F2, E2), dtype=jnp.bfloat16)
    param2 = jax.random.normal(kp, (F2, 1), dtype=jnp.float32)
    out2, eps2 = lpfs_forward(x2, param2, eps1, current_step=1)
    out2 = jax.block_until_ready(out2)
    ref2 = _lpfs_reference(x2, param2, eps2)
    assert jnp.allclose(out2.astype(jnp.float32), ref2.astype(jnp.float32),
                        atol=2e-2, rtol=2e-2), "mismatch vs reference (test 2, bf16)"

    # ---- Test 3: multi-step grid with a partial trailing row block ----
    B3, F3, E3 = 20, 16, 8
    x3 = jax.random.normal(kx3, (B3, F3, E3), dtype=jnp.float32)
    param3 = jax.random.normal(kp, (F3, 1), dtype=jnp.float32)
    out3, eps3 = lpfs_forward(x3, param3, eps2, current_step=7, row_tile=8)
    out3 = jax.block_until_ready(out3)
    ref3 = _lpfs_reference(x3, param3, eps3)
    assert jnp.allclose(out3, ref3, atol=1e-5, rtol=1e-5), "mismatch vs reference (test 3, grid)"

    # ---- Test 4: F*E not a multiple of 128 -> batch-row folding into lanes ----
    B4, F4, E4 = 16, 9, 8      # fe = 72; fold R = 16 -> lane = 1152 (multiple of 128)
    x4 = jax.random.normal(kx4, (B4, F4, E4), dtype=jnp.float32)
    param4 = jax.random.normal(kp, (F4, 1), dtype=jnp.float32)
    out4, eps4 = lpfs_forward(x4, param4, eps3, current_step=11)
    out4 = jax.block_until_ready(out4)
    ref4 = _lpfs_reference(x4, param4, eps4)
    assert jnp.allclose(out4, ref4, atol=1e-5, rtol=1e-5), "mismatch vs reference (test 4, fold)"

    print("KERNEL_OK")
</pallas_src>

<mosaic_0001>
module attributes {stable_mosaic.version = 11 : i64} {
  func.func @_lpfs_gate_mul_kernel(%arg0: i32, %arg1: memref<1x32xf32, #tpu.memory_space<vmem>>, %arg2: memref<2x32xf32, #tpu.memory_space<vmem>>, %arg3: memref<2x32xf32, #tpu.memory_space<vmem>>) attributes {dimension_semantics = [#tpu.dimension_semantics<parallel>], iteration_bounds = array<i64: 1>, scalar_prefetch = 0 : i64, scratch_operands = 0 : i64, tpu.core_type = #tpu.core_type<tc>, window_params = [{pipeline_mode = #tpu.pipeline_mode<synchronous>, transform_indices = @transform_0, window_bounds = array<i64: 1, 32>}, {transform_indices = @transform_1, window_bounds = array<i64: 2, 32>}, {transform_indices = @transform_2, window_bounds = array<i64: 2, 32>}]} {
    %c0 = arith.constant 0 : index
    %c0_0 = arith.constant 0 : index
    %0 = vector.load %arg2[%c0, %c0_0] : memref<2x32xf32, #tpu.memory_space<vmem>>, vector<2x32xf32>
    %c0_1 = arith.constant 0 : index
    %c0_2 = arith.constant 0 : index
    %1 = vector.load %arg1[%c0_1, %c0_2] : memref<1x32xf32, #tpu.memory_space<vmem>>, vector<1x32xf32>
    %2 = vector.broadcast %1 : vector<1x32xf32> to vector<2x32xf32>
    %3 = arith.mulf %0, %2 : vector<2x32xf32>
    %c0_3 = arith.constant 0 : index
    %c0_4 = arith.constant 0 : index
    %4 = vector.load %arg3[%c0_3, %c0_4] : memref<2x32xf32, #tpu.memory_space<vmem>>, vector<2x32xf32>
    tpu.vector_store %arg3[%c0_3, %c0_4], %3 {strides = array<i32>} : memref<2x32xf32, #tpu.memory_space<vmem>>, vector<2x32xf32>,
    return
  }
  func.func @transform_0(%arg0: i32) -> (i32, i32) {
    %c0_i32 = arith.constant 0 : i32
    %c0_i32_0 = arith.constant 0 : i32
    %c0_i32_1 = arith.constant 0 : i32
    return %c0_i32, %c0_i32_0 : i32, i32
  }
  func.func @transform_1(%arg0: i32) -> (i32, i32) {
    %c0_i32 = arith.constant 0 : i32
    %c0_i32_0 = arith.constant 0 : i32
    return %arg0, %c0_i32 : i32, i32
  }
  func.func @transform_2(%arg0: i32) -> (i32, i32) {
    %c0_i32 = arith.constant 0 : i32
    %c0_i32_0 = arith.constant 0 : i32
    return %arg0, %c0_i32 : i32, i32
  }
}

</mosaic_0001>

<llo_original>
// kernel: tpu_custom_call.1
$region0: #{tpu_custom_call.1}
  #allocation0 [shape = 'u32[]', space=smem, size = 0x4, offset = 0x4, fixed_abs, tag = 'smem constant byte address 0x4 - core index']
  #allocation1 [shape = 'u32[144,128]{1,0:T(1,128)}', space=vmem, size = 0x12000, scoped, tag = 'internal scratch']
  %s0 = inlined_call_operand.hbm [shape: f32[1,32], index: 0, kind: input, shape index: {}]
  %s1 = inlined_call_operand.vmem [shape: f32[2,32], index: 1, kind: input, shape index: {}]
  %s2 = inlined_call_operand.hbm [shape: f32[2,32], index: 2, kind: output, shape index: {}]
  %s3 = sld [smem:[#allocation0]]
  $region22: #{tpu_custom_call.1} parent=0
    _
  %s5 = ssub.s32 1, %s3
  %s6 = scalar_select 0, %s5, %s3
  $region1: #{tpu_custom_call.1} parent=0
    #allocation2 [shape = 'u8[512]{0}', space=vmem, size = 0x400, scoped, tag = 'input window, operand 0, single buffered']
    #allocation3 [shape = 's32[1]{0}', space=sflag, size = 0x4, scoped, tag = 'scoped memory for tpu_custom_call.1']
    #allocation4 [shape = 's32[1]{0}', space=sflag, size = 0x4, scoped, tag = 'scoped memory for tpu_custom_call.1']
    #allocation5 [shape = 'u8[1024]{0}', space=vmem, size = 0x400, scoped, tag = 'output window, operand 0, single buffered']
    %7 = vsyncpa [#allocation3], 0
    %8 = vsyncpa [#allocation4], 0
    // Predicated region
    $region2: #{tpu_custom_call.1} parent=1 // pred_check
      _
    $region3: #{tpu_custom_call.1} parent=1 // pred_check_branch
      %10 = sbr.rel (0) target = $region5
    $region4: #{tpu_custom_call.1} parent=1 // pred_region
      %s12 = ssub.s32 16, 16
      %13 = vsyncadd [#allocation3], %s12
      %s15 = sshll.u32 [#allocation2], 4
      %s16 = int_to_ptr.vmem [resolvable:$true] %s15
      %18 = dma.hbm_to_vmem [thread:$0]  %s0, 16, %s16, [#allocation3]
    $region5: #{tpu_custom_call.1} parent=1 // pred_fallthru
      _
    // Predicated region
    $region6: #{tpu_custom_call.1} parent=1 // pred_check
      _
    $region7: #{tpu_custom_call.1} parent=1 // pred_check_branch
      %20 = sbr.rel (0) target = $region9
    $region8: #{tpu_custom_call.1} parent=1 // pred_region
      _
    $region9: #{tpu_custom_call.1} parent=1 // pred_fallthru
      _
    // Predicated region
    $region10: #{tpu_custom_call.1} parent=1 // pred_check
      _
    $region11: #{tpu_custom_call.1} parent=1 // pred_check_branch
      %22 = sbr.rel (0) target = $region13
    $region12: #{tpu_custom_call.1} parent=1 // pred_region
      %23 = dma.done [#allocation3], 16
    $region13: #{tpu_custom_call.1} parent=1 // pred_fallthru
      _
    %v24 = vld [vmem:[%s1] sm:$0x3]
    %v25 = vld [vmem:[#allocation2] sm:$0x1]
    %v27 = vlaneseq
    %v28 = vshrl.u32 %v27, 7
    %v29 = vsub.s32 0, %v28
    %v30 = vrot.slane %v25, %v29
    %v32 = vmul.f32 %v24, %v30
    %vm33 = vcmask 254976
    %34 = vst.msk [vmem:[#allocation5] sm:$0x3] %vm33, %v32
    // Predicated region
    $region14: #{tpu_custom_call.1} parent=1 // pred_check
      _
    $region15: #{tpu_custom_call.1} parent=1 // pred_check_branch
      %36 = sbr.rel (0) target = $region17
    $region16: #{tpu_custom_call.1} parent=1 // pred_region
      %s38 = ssub.s32 32, 32
      %39 = vsyncadd [#allocation4], %s38
      %s41 = sshll.u32 [#allocation5], 4
      %s42 = int_to_ptr.vmem [resolvable:$true] %s41
      %44 = dma.vmem_to_hbm [thread:$0]  %s42, 32, %s2, [#allocation4]
    $region17: #{tpu_custom_call.1} parent=1 // pred_fallthru
      _
    // Predicated region
    $region18: #{tpu_custom_call.1} parent=1 // pred_check
      _
    $region19: #{tpu_custom_call.1} parent=1 // pred_check_branch
      %46 = sbr.rel (0) target = $region21
    $region20: #{tpu_custom_call.1} parent=1 // pred_region
      %47 = dma.done [#allocation4], 32
    $region21: #{tpu_custom_call.1} parent=1 // pred_fallthru
      _
    %48 = vsyncpa [#allocation3], 1
    %49 = vsyncpa [#allocation4], 1

</llo_original>
